<compile_context>
chip_gen: v7x
topology: tpu7x:2x2x1
jax: 0.10.0
libtpu: 0.0.40
codegen_flags: <defaults>
</compile_context>

<pallas_src>
import functools

import jax
import jax.numpy as jnp
from jax.experimental import pallas as pl
from jax.experimental.pallas import tpu as pltpu


# ---------------------------------------------------------------------------
# Kernel 1: condition normalisation (from generate()):
#   tmp_c[:, 0::2] /= img_w ;  tmp_c[:, 1::2] /= img_h
# Layout inside the kernel: (C, N)  -- feature axis on sublanes, N on lanes.
# ---------------------------------------------------------------------------
def _normalize_kernel(wh_ref, x_ref, o_ref):
    # wh_ref: SMEM (2,) = [img_w, img_h]; x_ref/o_ref: VMEM (C, N)
    x = x_ref[...].astype(jnp.float32)
    feat = jax.lax.broadcasted_iota(jnp.int32, x.shape, 0)      # feature index
    den = jnp.where(feat % 2 == 0, wh_ref[0], wh_ref[1])        # even->img_w, odd->img_h
    o_ref[...] = (x / den).astype(o_ref.dtype)


def normalize_conditions(cond, img_w, img_h):
    """cond: (N, C) pixel-space boxes; returns (N, C) normalised."""
    n, c = cond.shape
    wh = jnp.asarray([img_w, img_h], dtype=jnp.float32)
    cond_t = cond.T                                             # (C, N) lane-dense
    out_t = pl.pallas_call(
        _normalize_kernel,
        out_shape=jax.ShapeDtypeStruct((c, n), cond.dtype),
        in_specs=[
            pl.BlockSpec(memory_space=pltpu.MemorySpace.SMEM),  # scalars
            pl.BlockSpec(memory_space=pltpu.MemorySpace.VMEM),
        ],
        out_specs=pl.BlockSpec(memory_space=pltpu.MemorySpace.VMEM),
    )(wh, cond_t)
    return out_t.T


# ---------------------------------------------------------------------------
# Kernel 2: augment_data(boxes)
#
# Faithful to the PyTorch *view* semantics of the reference:
#   xywh = boxes[:, :, :4]; xywh += rand * 0.005   -> offsets EVERY row
#   (the subsequent `boxes[:, 1:, :4] = xywh[:, 1:]` is a no-op on a view)
#   delta[:, 1:] = xywh[:, 1:] - xywh[:, :-1]
#   if batch > 1: delta[:, 0] = delta[:, 1]  else delta[:, 0] stays as input
#
# Layout inside the kernel: (C=8, B*T) -- time flattened onto the lane axis.
# ---------------------------------------------------------------------------
def _augment_kernel(boxes_ref, rand_ref, o_ref, *, interval, batch_gt_one):
    n = boxes_ref.shape[1]                                      # B*T (static)
    xywh = boxes_ref[:4, :] + rand_ref[...] * 0.005             # (4, B*T)
    o_ref[:4, :] = xywh.astype(o_ref.dtype)

    # shifted difference: d[:, i] = xywh[:, i] - xywh[:, i-1]  (lane roll, XLU)
    prev = pltpu.roll(xywh, shift=1, axis=1)
    d = xywh - prev

    col = jax.lax.broadcasted_iota(jnp.int32, d.shape, 1)
    is_first = (col % interval) == 0                            # row 0 of each track
    if batch_gt_one:
        nxt = pltpu.roll(d, shift=n - 1, axis=1)                # nxt[:, i] = d[:, i+1]
        d = jnp.where(is_first, nxt, d)                         # delta[:,0] = delta[:,1]
    else:
        d = jnp.where(is_first, boxes_ref[4:, :], d)            # row-0 delta untouched
    o_ref[4:, :] = d.astype(o_ref.dtype)


def augment_data(boxes, rand):
    """Pallas version of BasePositionPredictor.augment_data.

    `rand` plays the role of torch.rand_like(xywh): uniform [0, 1) of shape
    (B, T, 4), generated deterministically on the host with jax.random.
    Returns a (B, T, 8) array (matching the reference's unsqueeze semantics).
    """
    if boxes.ndim == 2:
        boxes = boxes[None]
    if rand.ndim == 2:
        rand = rand[None]
    b, t, c = boxes.shape
    assert c == 8, f"expected 8 box features, got {c}"
    assert rand.shape == (b, t, 4), f"rand shape {rand.shape} != {(b, t, 4)}"

    boxes_t = boxes.reshape(b * t, c).T                         # (8, B*T) lane-dense
    rand_t = rand.reshape(b * t, 4).T                           # (4, B*T)
    kernel = functools.partial(_augment_kernel, interval=t, batch_gt_one=(b > 1))
    out_t = pl.pallas_call(
        kernel,
        out_shape=jax.ShapeDtypeStruct((c, b * t), boxes.dtype),
        in_specs=[
            pl.BlockSpec(memory_space=pltpu.MemorySpace.VMEM),
            pl.BlockSpec(memory_space=pltpu.MemorySpace.VMEM),
        ],
        out_specs=pl.BlockSpec(memory_space=pltpu.MemorySpace.VMEM),
    )(boxes_t, rand_t)
    return out_t.T.reshape(b, t, c)


# ---------------------------------------------------------------------------
# Abstract forward
# ---------------------------------------------------------------------------
def base_forward(x):
    # TODO(synk): BasePositionPredictor.forward raises NotImplementedError in
    # the reference (abstract base class) -- no concrete graph to translate.
    raise NotImplementedError


# ---------------------------------------------------------------------------
# Pure-JAX references for correctness checks
# ---------------------------------------------------------------------------
def _normalize_ref(cond, img_w, img_h):
    den = jnp.where(jnp.arange(cond.shape[1]) % 2 == 0, img_w, img_h)
    den = den.astype(jnp.float32)[None, :]
    return (cond.astype(jnp.float32) / den).astype(cond.dtype)


def _augment_ref(boxes, rand):
    if boxes.ndim == 2:
        boxes = boxes[None]
    if rand.ndim == 2:
        rand = rand[None]
    xywh = boxes[..., :4] + rand * 0.005
    d = xywh[:, 1:] - xywh[:, :-1]
    d0 = d[:, :1] if boxes.shape[0] > 1 else boxes[:, :1, 4:]
    return jnp.concatenate([xywh, jnp.concatenate([d0, d], axis=1)], axis=-1)


if __name__ == "__main__":
    key = jax.random.PRNGKey(0)
    k1, k2, k3 = jax.random.split(key, 3)

    config = {"interval": 8}  # module's __init__ just stores config; no weights.
    img_w, img_h = 640.0, 480.0

    # conditions: (N=8, C=8) pixel-space boxes, normalised by img_w / img_h
    cond = jax.random.uniform(k1, (8, 8), jnp.float32) * 512.0
    norm_out = jax.block_until_ready(normalize_conditions(cond, img_w, img_h))
    norm_ref = _normalize_ref(cond, img_w, img_h)
    assert jnp.allclose(norm_out, norm_ref, atol=1e-6, rtol=1e-6), "normalize mismatch"

    # boxes: (B=2, T=8, C=8) normalised boxes + deltas, plus the rand offsets
    boxes = jax.random.uniform(k2, (2, config["interval"], 8), jnp.float32)
    rand = jax.random.uniform(k3, (2, config["interval"], 4), jnp.float32)
    aug_out = jax.block_until_ready(augment_data(boxes, rand))
    aug_ref = _augment_ref(boxes, rand)
    assert jnp.allclose(aug_out, aug_ref, atol=1e-6, rtol=1e-6), "augment mismatch"

    # also exercise the batch==1 / 2-D input path (row-0 delta left untouched)
    boxes1 = jax.random.uniform(k2, (config["interval"], 8), jnp.float32)
    rand1 = jax.random.uniform(k3, (config["interval"], 4), jnp.float32)
    aug1_out = jax.block_until_ready(augment_data(boxes1, rand1))
    aug1_ref = _augment_ref(boxes1, rand1)
    assert jnp.allclose(aug1_out, aug1_ref, atol=1e-6, rtol=1e-6), "augment(b=1) mismatch"

    print("KERNEL_OK")
</pallas_src>

<mosaic_0001>
module attributes {stable_mosaic.version = 11 : i64} {
  func.func @_normalize_kernel(%arg0: memref<2xf32, #tpu.memory_space<smem>>, %arg1: memref<8x8xf32, #tpu.memory_space<vmem>>, %arg2: memref<8x8xf32, #tpu.memory_space<vmem>>) attributes {dimension_semantics = [], scalar_prefetch = 0 : i64, scratch_operands = 0 : i64, tpu.core_type = #tpu.core_type<tc>} {
    %c0 = arith.constant 0 : index
    %c0_0 = arith.constant 0 : index
    %0 = vector.load %arg1[%c0, %c0_0] : memref<8x8xf32, #tpu.memory_space<vmem>>, vector<8x8xf32>
    %1 = tpu.iota {dimensions = array<i32: 0>} : vector<8x8xi32>
    %c2_i32 = arith.constant 2 : i32
    %c0_i32 = arith.constant 0 : i32
    %2 = arith.cmpi eq, %c2_i32, %c0_i32 : i32
    %c1_i32 = arith.constant 1 : i32
    %3 = arith.select %2, %c1_i32, %c2_i32 : i32
    %4 = vector.broadcast %3 : i32 to vector<8x8xi32>
    %5 = arith.remsi %1, %4 : vector<8x8xi32>
    %c0_i32_1 = arith.constant 0 : i32
    %6 = vector.broadcast %c0_i32_1 : i32 to vector<8x8xi32>
    %7 = arith.cmpi ne, %5, %6 : vector<8x8xi32>
    %c0_i32_2 = arith.constant 0 : i32
    %8 = vector.broadcast %c0_i32_2 : i32 to vector<8x8xi32>
    %9 = arith.cmpi slt, %5, %8 : vector<8x8xi32>
    %c0_i32_3 = arith.constant 0 : i32
    %10 = arith.cmpi slt, %3, %c0_i32_3 : i32
    %11 = vector.broadcast %10 : i1 to vector<8x8xi1>
    %12 = vector.broadcast %11 : vector<8x8xi1> to vector<8x8xi1>
    %13 = arith.xori %9, %12 : vector<8x8xi1>
    %14 = arith.andi %13, %7 : vector<8x8xi1>
    %15 = vector.broadcast %3 : i32 to vector<8x8xi32>
    %16 = arith.addi %5, %15 : vector<8x8xi32>
    %17 = arith.select %14, %16, %5 : vector<8x8xi1>, vector<8x8xi32>
    %c0_i32_4 = arith.constant 0 : i32
    %18 = vector.broadcast %c0_i32_4 : i32 to vector<8x8xi32>
    %19 = arith.cmpi eq, %17, %18 : vector<8x8xi32>
    %c0_5 = arith.constant 0 : index
    %20 = memref.load %arg0[%c0_5] : memref<2xf32, #tpu.memory_space<smem>>
    %c1 = arith.constant 1 : index
    %21 = memref.load %arg0[%c1] : memref<2xf32, #tpu.memory_space<smem>>
    %22 = vector.broadcast %20 : f32 to vector<8x8xf32>
    %23 = vector.broadcast %21 : f32 to vector<8x8xf32>
    %24 = arith.select %19, %22, %23 : vector<8x8xi1>, vector<8x8xf32>
    %25 = arith.divf %0, %24 : vector<8x8xf32>
    %c0_6 = arith.constant 0 : index
    %c0_7 = arith.constant 0 : index
    %26 = vector.load %arg2[%c0_6, %c0_7] : memref<8x8xf32, #tpu.memory_space<vmem>>, vector<8x8xf32>
    tpu.vector_store %arg2[%c0_6, %c0_7], %25 {strides = array<i32>} : memref<8x8xf32, #tpu.memory_space<vmem>>, vector<8x8xf32>,
    return
  }
}

</mosaic_0001>

<llo_original>
// kernel: tpu_custom_call.1
$region0: #{tpu_custom_call.1}
  #allocation0 [shape = 'u32[]', space=smem, size = 0x4, offset = 0x4, fixed_abs, tag = 'smem constant byte address 0x4 - core index']
  #allocation1 [shape = 'u32[144,128]{1,0:T(1,128)}', space=vmem, size = 0x12000, scoped, tag = 'internal scratch']
  %s0 = inlined_call_operand.hbm [shape: f32[2], index: 0, kind: input, shape index: {}]
  %s1 = inlined_call_operand.hbm [shape: f32[8,8], index: 1, kind: input, shape index: {}]
  %s2 = inlined_call_operand.hbm [shape: f32[8,8], index: 2, kind: output, shape index: {}]
  %s3 = sld [smem:[#allocation0]]
  $region26: #{tpu_custom_call.1} parent=0
    _
  %s5 = ssub.s32 1, %s3
  %s6 = scalar_select 0, %s5, %s3
  $region1: #{tpu_custom_call.1} parent=0
    #allocation2 [shape = 'u8[512]{0}', space=smem, size = 0x200, scoped, tag = 'input window, operand 0, single buffered']
    #allocation3 [shape = 's32[1]{0}', space=sflag, size = 0x4, scoped, tag = 'scoped memory for tpu_custom_call.1']
    #allocation4 [shape = 's32[1]{0}', space=sflag, size = 0x4, scoped, tag = 'scoped memory for tpu_custom_call.1']
    #allocation5 [shape = 's32[1]{0}', space=sflag, size = 0x4, scoped, tag = 'scoped memory for tpu_custom_call.1']
    #allocation6 [shape = 'u8[4096]{0}', space=vmem, size = 0x1000, scoped, tag = 'input window, operand 1, single buffered']
    #allocation7 [shape = 'u8[4096]{0}', space=vmem, size = 0x1000, scoped, tag = 'output window, operand 0, single buffered']
    %7 = vsyncpa [#allocation5], 0
    %8 = vsyncpa [#allocation3], 0
    %9 = vsyncpa [#allocation4], 0
    // Predicated region
    $region2: #{tpu_custom_call.1} parent=1 // pred_check
      _
    $region3: #{tpu_custom_call.1} parent=1 // pred_check_branch
      %11 = sbr.rel (0) target = $region5
    $region4: #{tpu_custom_call.1} parent=1 // pred_region
      %s13 = ssub.s32 16, 16
      %14 = vsyncadd [#allocation5], %s13
      %17 = dma.hbm_to_smem %s0, 16, [#allocation2], [#allocation5]
    $region5: #{tpu_custom_call.1} parent=1 // pred_fallthru
      _
    // Predicated region
    $region6: #{tpu_custom_call.1} parent=1 // pred_check
      _
    $region7: #{tpu_custom_call.1} parent=1 // pred_check_branch
      %19 = sbr.rel (0) target = $region9
    $region8: #{tpu_custom_call.1} parent=1 // pred_region
      %s21 = ssub.s32 128, 128
      %22 = vsyncadd [#allocation3], %s21
      %s24 = sshll.u32 [#allocation6], 4
      %s25 = int_to_ptr.vmem [resolvable:$true] %s24
      %27 = dma.hbm_to_vmem [thread:$0]  %s1, 128, %s25, [#allocation3]
    $region9: #{tpu_custom_call.1} parent=1 // pred_fallthru
      _
    // Predicated region
    $region10: #{tpu_custom_call.1} parent=1 // pred_check
      _
    $region11: #{tpu_custom_call.1} parent=1 // pred_check_branch
      %29 = sbr.rel (0) target = $region13
    $region12: #{tpu_custom_call.1} parent=1 // pred_region
      %30 = dma.done [#allocation5], 16
    $region13: #{tpu_custom_call.1} parent=1 // pred_fallthru
      _
    // Predicated region
    $region14: #{tpu_custom_call.1} parent=1 // pred_check
      _
    $region15: #{tpu_custom_call.1} parent=1 // pred_check_branch
      %32 = sbr.rel (0) target = $region17
    $region16: #{tpu_custom_call.1} parent=1 // pred_region
      %33 = dma.done [#allocation3], 128
    $region17: #{tpu_custom_call.1} parent=1 // pred_fallthru
      _
    %34 = sfence
    %v35 = vld [vmem:[#allocation6] sm:$0xff]
    %v36 = vlaneseq
    %v37 = vshrl.u32 %v36, 7
    %vm38 = vcmp.lt.s32.totalorder %v37, 0
    %v39 = vsub.s32 0, %v37
    %v40 = vsel %vm38, %v39, %v37
    %v41 = vshrl.u32 %v40, 1
    %v42 = vand.u32 %v40, 1
    %v43 = vsub.s32 0, %v42
    %v44 = vsel %vm38, %v43, %v42
    %vm45 = vcmp.ne.s32.totalorder %v44, 0
    %vm46 = vcmp.lt.s32.totalorder %v44, 0
    %vm47 = vmand %vm46, %vm45
    %v48 = vadd.s32 %v44, 2
    %v49 = vsel %vm47, %v48, %v44
    %vm50 = vcmp.eq.s32.totalorder %v49, 0
    %s51 = sld [smem:[#allocation2]]
    %s52 = sld [smem:[#allocation2 + $0x1]]
    %v53 = vstv %s51
    %v54 = vstv %s52
    %v55 = vsel %vm50, %v53, %v54
    %v56 = vrcp.pop %v55
    %v57 = vmul.f32 %v35, %v56
    %vm58 = vcmask 64512
    %59 = vst.msk [vmem:[#allocation7] sm:$0xff] %vm58, %v57
    // Predicated region
    $region18: #{tpu_custom_call.1} parent=1 // pred_check
      _
    $region19: #{tpu_custom_call.1} parent=1 // pred_check_branch
      %61 = sbr.rel (0) target = $region21
    $region20: #{tpu_custom_call.1} parent=1 // pred_region
      %s63 = ssub.s32 128, 128
      %64 = vsyncadd [#allocation4], %s63
      %s66 = sshll.u32 [#allocation7], 4
      %s67 = int_to_ptr.vmem [resolvable:$true] %s66
      %69 = dma.vmem_to_hbm [thread:$0]  %s67, 128, %s2, [#allocation4]
    $region21: #{tpu_custom_call.1} parent=1 // pred_fallthru
      _
    // Predicated region
    $region22: #{tpu_custom_call.1} parent=1 // pred_check
      _
    $region23: #{tpu_custom_call.1} parent=1 // pred_check_branch
      %71 = sbr.rel (0) target = $region25
    $region24: #{tpu_custom_call.1} parent=1 // pred_region
      %72 = dma.done [#allocation4], 128
    $region25: #{tpu_custom_call.1} parent=1 // pred_fallthru
      _
    %73 = vsyncpa [#allocation3], 1
    %74 = vsyncpa [#allocation4], 1
    %75 = vsyncpa [#allocation5], 1

</llo_original>
